<compile_context>
chip_gen: v6e
topology: v6e:2x2x1
jax: 0.10.0
libtpu: 0.0.40
codegen_flags: <defaults>
</compile_context>

<pallas_src>
import math
import numpy as np
import jax
import jax.numpy as jnp
from jax.experimental import pallas as pl
from jax.experimental.pallas import tpu as pltpu


# JPEG-style quantization table from the PyTorch module (divided by 255).
_JPEG_TABLE = np.array(
    [16, 16, 16, 16, 17, 18, 21, 24, 16, 16, 16, 16, 17, 19, 22, 25,
     16, 16, 17, 18, 20, 22, 25, 29, 16, 16, 18, 21, 24, 27, 31, 36,
     17, 17, 20, 24, 30, 35, 41, 47, 18, 19, 22, 27, 35, 44, 54, 65,
     21, 22, 25, 31, 41, 54, 70, 88, 24, 25, 29, 36, 47, 65, 88, 115],
    dtype=np.float32) / 255.0


def _dct_basis_64():
    """The fixed (64, 64) IDCT basis matrix from the PyTorch constructor."""
    kernel = np.zeros((64, 64), dtype=np.float32)
    r1 = math.sqrt(1.0 / 8)
    r2 = math.sqrt(2.0 / 8)
    for i in range(8):
        _u = 2 * i + 1
        for j in range(8):
            _v = 2 * j + 1
            index = i * 8 + j
            for u in range(8):
                for v in range(8):
                    index2 = u * 8 + v
                    t = math.cos(_u * u * math.pi / 16) * math.cos(_v * v * math.pi / 16)
                    t = t * r1 if u == 0 else t * r2
                    t = t * r1 if v == 0 else t * r2
                    kernel[index, index2] = t
    return kernel


def _implicit_trans_kernel(x_ref, w_ref, k_ref, o_ref):
    # x_ref/w_ref: (1, 64, S), k_ref: (64, 64), o_ref: (1, 64, S)
    xw = x_ref[0] * w_ref[0]                                   # fused x * weight
    y = jnp.dot(k_ref[...], xw, preferred_element_type=jnp.float32)
    o_ref[0] = y.astype(o_ref.dtype)


def _pick_spatial_tile(hw):
    """Largest lane-dense tile that divides H*W (falls back to full extent)."""
    for t in (2048, 1024, 512, 256, 128):
        if hw % t == 0:
            return t
    return hw


def implicit_trans(x, weight, factor, bias, base_kernel, table):
    """x, weight: (N, 64, H, W); factor/bias/table: (64,); base_kernel: (64, 64)."""
    N, C, H, W = x.shape
    assert C == 64, "ImplicitTrans uses a fixed 64x64 DCT kernel"
    HW = H * W

    weight = jnp.broadcast_to(weight, x.shape)
    x_f = x.reshape(N, C, HW)                      # free reshape, no transpose/pad
    w_f = weight.reshape(N, C, HW)

    # Fold the learned per-output-channel scale into the DCT basis (one-time).
    scale = table * factor + bias                  # (64,)
    kmat = (base_kernel * scale[:, None]).astype(jnp.float32)   # (Cout=64, Cin=64)

    S = _pick_spatial_tile(HW)
    grid = (N, HW // S)

    out = pl.pallas_call(
        _implicit_trans_kernel,
        out_shape=jax.ShapeDtypeStruct((N, C, HW), x.dtype),
        grid_spec=pltpu.PrefetchScalarGridSpec(
            num_scalar_prefetch=0,
            grid=grid,
            in_specs=[
                pl.BlockSpec((1, C, S), lambda n, s: (n, 0, s)),   # x tile
                pl.BlockSpec((1, C, S), lambda n, s: (n, 0, s)),   # weight tile
                pl.BlockSpec((C, C), lambda n, s: (0, 0)),         # scaled DCT matrix
            ],
            out_specs=pl.BlockSpec((1, C, S), lambda n, s: (n, 0, s)),
        ),
        compiler_params=pltpu.CompilerParams(
            dimension_semantics=("parallel", "parallel")),
    )(x_f, w_f, kmat)

    return out.reshape(N, C, H, W)


def _reference(x, weight, factor, bias, base_kernel, table):
    """Pure-JAX reference matching the PyTorch forward."""
    scale = table * factor + bias
    kmat = (base_kernel * scale[:, None]).reshape(64, 64, 1, 1)   # OIHW 1x1
    xw = x * weight
    dn = jax.lax.conv_dimension_numbers(xw.shape, kmat.shape, ("NCHW", "OIHW", "NCHW"))
    return jax.lax.conv_general_dilated(
        xw, kmat, (1, 1), "VALID", dimension_numbers=dn,
        precision=jax.lax.Precision.HIGHEST)


if __name__ == "__main__":
    N, C, H, W = 2, 64, 16, 16   # module hard-codes 64 channels (8x8 DCT basis)

    key = jax.random.PRNGKey(0)
    kx, kw, kf, kb = jax.random.split(key, 4)

    x = jax.random.normal(kx, (N, C, H, W), dtype=jnp.float32)
    weight = jax.random.uniform(kw, (N, C, H, W), jnp.float32, 0.5, 1.5)
    # Learned parameters: factor ~ around 1 (init ones), bias ~ around 0 (init zeros).
    factor = 1.0 + 0.1 * jax.random.normal(kf, (C,), dtype=jnp.float32)
    bias = 0.01 * jax.random.normal(kb, (C,), dtype=jnp.float32)

    table = jnp.asarray(_JPEG_TABLE)
    base_kernel = jnp.asarray(_dct_basis_64())

    out = jax.block_until_ready(
        implicit_trans(x, weight, factor, bias, base_kernel, table))
    ref = jax.block_until_ready(
        _reference(x, weight, factor, bias, base_kernel, table))

    assert out.shape == (N, C, H, W)
    assert jnp.allclose(out, ref, atol=1e-3, rtol=1e-3), "mismatch vs reference"

    print("KERNEL_OK")
</pallas_src>

<mosaic_0001>
module attributes {stable_mosaic.version = 11 : i64} {
  func.func @_implicit_trans_kernel(%arg0: i32, %arg1: i32, %arg2: memref<1x64x256xf32, #tpu.memory_space<vmem>>, %arg3: memref<1x64x256xf32, #tpu.memory_space<vmem>>, %arg4: memref<64x64xf32, #tpu.memory_space<vmem>>, %arg5: memref<1x64x256xf32, #tpu.memory_space<vmem>>) attributes {dimension_semantics = [#tpu.dimension_semantics<parallel>, #tpu.dimension_semantics<parallel>], iteration_bounds = array<i64: 2, 1>, scalar_prefetch = 0 : i64, scratch_operands = 0 : i64, tpu.core_type = #tpu.core_type<tc>, window_params = [{transform_indices = @transform_0, window_bounds = array<i64: 1, 64, 256>}, {transform_indices = @transform_1, window_bounds = array<i64: 1, 64, 256>}, {pipeline_mode = #tpu.pipeline_mode<synchronous>, transform_indices = @transform_2, window_bounds = array<i64: 64, 64>}, {transform_indices = @transform_3, window_bounds = array<i64: 1, 64, 256>}]} {
    %c0 = arith.constant 0 : index
    %c0_0 = arith.constant 0 : index
    %c0_1 = arith.constant 0 : index
    %0 = vector.load %arg2[%c0, %c0_0, %c0_1] : memref<1x64x256xf32, #tpu.memory_space<vmem>>, vector<1x64x256xf32>
    %1 = vector.shape_cast %0 : vector<1x64x256xf32> to vector<64x256xf32>
    %c0_2 = arith.constant 0 : index
    %c0_3 = arith.constant 0 : index
    %c0_4 = arith.constant 0 : index
    %2 = vector.load %arg3[%c0_2, %c0_3, %c0_4] : memref<1x64x256xf32, #tpu.memory_space<vmem>>, vector<1x64x256xf32>
    %3 = vector.shape_cast %2 : vector<1x64x256xf32> to vector<64x256xf32>
    %4 = arith.mulf %1, %3 : vector<64x256xf32>
    %c0_5 = arith.constant 0 : index
    %c0_6 = arith.constant 0 : index
    %5 = vector.load %arg4[%c0_5, %c0_6] : memref<64x64xf32, #tpu.memory_space<vmem>>, vector<64x64xf32>
    %cst = arith.constant dense<0.000000e+00> : vector<64x256xf32>
    %6 = tpu.matmul %5, %4, %cst {dimension_numbers = #tpu.dot_dimension_numbers<[1], [0], [0], [1], [0, 0, 1, 1], [], []>} : vector<64x64xf32>, vector<64x256xf32>, vector<64x256xf32> -> vector<64x256xf32>
    %c0_7 = arith.constant 0 : index
    %c0_8 = arith.constant 0 : index
    %c0_9 = arith.constant 0 : index
    %7 = vector.load %arg5[%c0_7, %c0_8, %c0_9] : memref<1x64x256xf32, #tpu.memory_space<vmem>>, vector<1x64x256xf32>
    %8 = vector.shape_cast %7 : vector<1x64x256xf32> to vector<64x256xf32>
    %9 = vector.shape_cast %6 : vector<64x256xf32> to vector<1x64x256xf32>
    tpu.vector_store %arg5[%c0_7, %c0_8, %c0_9], %9 {strides = array<i32>} : memref<1x64x256xf32, #tpu.memory_space<vmem>>, vector<1x64x256xf32>,
    return
  }
  func.func @transform_0(%arg0: i32, %arg1: i32) -> (i32, i32, i32) {
    %c0_i32 = arith.constant 0 : i32
    %c0_i32_0 = arith.constant 0 : i32
    return %arg0, %c0_i32, %arg1 : i32, i32, i32
  }
  func.func @transform_1(%arg0: i32, %arg1: i32) -> (i32, i32, i32) {
    %c0_i32 = arith.constant 0 : i32
    %c0_i32_0 = arith.constant 0 : i32
    return %arg0, %c0_i32, %arg1 : i32, i32, i32
  }
  func.func @transform_2(%arg0: i32, %arg1: i32) -> (i32, i32) {
    %c0_i32 = arith.constant 0 : i32
    %c0_i32_0 = arith.constant 0 : i32
    %c0_i32_1 = arith.constant 0 : i32
    return %c0_i32, %c0_i32_0 : i32, i32
  }
  func.func @transform_3(%arg0: i32, %arg1: i32) -> (i32, i32, i32) {
    %c0_i32 = arith.constant 0 : i32
    %c0_i32_0 = arith.constant 0 : i32
    return %arg0, %c0_i32, %arg1 : i32, i32, i32
  }
}

</mosaic_0001>

<llo_original>
// kernel: tpu_custom_call.1
$region0: #{tpu_custom_call.1}
  #allocation0 [shape = 'u32[]', space=smem, size = 0x4, offset = 0x4, fixed_abs, tag = 'smem constant byte address 0x4 - core index']
  #allocation1 [shape = 'u32[144,128]{1,0:T(1,128)}', space=vmem, size = 0x12000, scoped, tag = 'internal scratch']
  %s0 = inlined_call_operand.hbm [shape: f32[2,64,256], index: 0, kind: input, shape index: {}]
  %s1 = inlined_call_operand.hbm [shape: f32[2,64,256], index: 1, kind: input, shape index: {}]
  %s2 = inlined_call_operand.hbm [shape: f32[64,64], index: 2, kind: input, shape index: {}]
  %s3 = inlined_call_operand.hbm [shape: f32[2,64,256], index: 3, kind: output, shape index: {}]
  %s4 = sld [smem:[#allocation0]]
  $region57: #{tpu_custom_call.1} parent=0
    _
  %s6 = ssub.s32 1, %s4
  %s7 = scalar_select 0, %s6, %s4
  $region1: #{tpu_custom_call.1} parent=0
    #allocation2 [shape = 'u8[131072]{0}', space=vmem, size = 0x20000, scoped, tag = 'input window, operand 0']
    #allocation3 [shape = 's32[2]{0}', space=sflag, size = 0x8, scoped, tag = 'scoped memory for tpu_custom_call.1']
    #allocation4 [shape = 's32[2]{0}', space=sflag, size = 0x8, scoped, tag = 'scoped memory for tpu_custom_call.1']
    #allocation5 [shape = 'u8[131072]{0}', space=vmem, size = 0x20000, scoped, tag = 'input window, operand 1']
    #allocation6 [shape = 's32[2]{0}', space=sflag, size = 0x8, scoped, tag = 'scoped memory for tpu_custom_call.1']
    #allocation7 [shape = 'u8[32768]{0}', space=vmem, size = 0x8000, scoped, tag = 'input window, operand 2, single buffered']
    #allocation8 [shape = 'u8[131072]{0}', space=vmem, size = 0x20000, scoped, tag = 'output window, operand 0']
    %8 = vsyncpa [#allocation3], 0
    %s9 = scalar_lea.sflag [#allocation3], 1
    %10 = vsyncpa %s9, 0
    %11 = vsyncpa [#allocation6], 0
    %s12 = scalar_lea.sflag [#allocation6], 1
    %13 = vsyncpa %s12, 0
    %14 = vsyncpa [#allocation4], 0
    %s15 = scalar_lea.sflag [#allocation4], 1
    %16 = vsyncpa %s15, 0
    loop: start=0, step=1, limit=4
    $region2: #{tpu_custom_call.1} parent=1 // loop_pre_header
      _
    $region3: #{tpu_custom_call.1} parent=1 // loop_header
      %s18 = sphi 0, %s22
      %p19 = scmp.ge.s32.totalorder %s18, 4
      %s25 = sphi 0, %s37
      %s26 = sphi 0, %s33
      %s27 = sphi 0, %s25
      %s28 = sphi 0, %s26
      %s29 = sphi 0, %s27
      %s30 = sphi 0, %s28
      %s42 = sphi 0, %s44
      %s45 = sphi 0, %s42
      %s46 = sphi 0, %s45
      %s62 = sphi 0, %s46
      %s70 = sphi 0, %s72
      %s73 = sphi 0, %s70
      %s74 = sphi 0, %s73
      %s90 = sphi 0, %s74
      %s94 = sphi 0, %s94
      %s96 = sphi 0, %s94
      %s97 = sphi 0, %s96
      %s111 = sphi 0, %s97
      %s119 = sphi 0, %s121
      %s122 = sphi 0, %s119
      %s123 = sphi 0, %s122
      %s139 = sphi 0, %s123
    $region4: #{tpu_custom_call.1} parent=1 // loop_header_branch
      %21 = sbr.rel (%p19) target = $region8
    $region5: #{tpu_custom_call.1} parent=1 // loop_body
      %s23 = ssub.s32 %s18, 1
      %s24 = ssub.s32 %s18, 2
      %s31 = sadd.s32 1, %s26
      %p32 = scmp.ge.s32.totalorder %s31, 1
      %s33 = scalar_select %p32, 0, %s31
      %s34 = sadd.s32 1, %s25
      %s35 = scalar_select %p32, %s34, %s25
      %p36 = scmp.ge.s32.totalorder %s35, 2
      %s37 = scalar_select %p36, 0, %s35
      %s38 = ssub.s32 %s25, %s37
      %s39 = ssub.s32 %s26, %s33
      %s40 = sor.u32 %s38, %s39
      %p41 = scmp.eq.s32.totalorder %s40, 0
      %s43 = sadd.s32 %s42, 1
      %s44 = scalar_select %p41, %s42, %s43
      %p47 = pneg %p41
      %p48 = scmp.eq.s32.totalorder %s18, 1
      %p49 = por %p47, %p48
      %p50 = scmp.ne.s32.totalorder %s42, %s45
      %p51 = scmp.eq.s32.totalorder %s18, 0
      %p52 = por %p50, %p51
      %p53 = scmp.ne.s32.totalorder %s42, %s45
      %p54 = scmp.eq.s32.totalorder %s23, 1
      %p55 = por %p53, %p54
      %p56 = scmp.ne.s32.totalorder %s45, %s46
      %p57 = scmp.eq.s32.totalorder %s23, 0
      %p58 = por %p56, %p57
      %p59 = scmp.ne.s32.totalorder %s45, %s46
      %p60 = scmp.eq.s32.totalorder %s24, 1
      %p61 = por %p59, %p60
      %p63 = scmp.ne.s32.totalorder %s46, %s62
      %p64 = scmp.eq.s32.totalorder %s24, 0
      %p65 = por %p63, %p64
      %s66 = ssub.s32 %s25, %s37
      %s67 = ssub.s32 %s26, %s33
      %s68 = sor.u32 %s66, %s67
      %p69 = scmp.eq.s32.totalorder %s68, 0
      %s71 = sadd.s32 %s70, 1
      %s72 = scalar_select %p69, %s70, %s71
      %p75 = pneg %p69
      %p76 = scmp.eq.s32.totalorder %s18, 1
      %p77 = por %p75, %p76
      %p78 = scmp.ne.s32.totalorder %s70, %s73
      %p79 = scmp.eq.s32.totalorder %s18, 0
      %p80 = por %p78, %p79
      %p81 = scmp.ne.s32.totalorder %s70, %s73
      %p82 = scmp.eq.s32.totalorder %s23, 1
      %p83 = por %p81, %p82
      %p84 = scmp.ne.s32.totalorder %s73, %s74
      %p85 = scmp.eq.s32.totalorder %s23, 0
      %p86 = por %p84, %p85
      %p87 = scmp.ne.s32.totalorder %s73, %s74
      %p88 = scmp.eq.s32.totalorder %s24, 1
      %p89 = por %p87, %p88
      %p91 = scmp.ne.s32.totalorder %s74, %s90
      %p92 = scmp.eq.s32.totalorder %s24, 0
      %p93 = por %p91, %p92
      %s95 = sadd.s32 %s94, 1
      %p98 = scmp.eq.s32.totalorder %s18, 1
      %p99 = scmp.ne.s32.totalorder %s94, %s96
      %p100 = scmp.eq.s32.totalorder %s18, 0
      %p101 = por %p99, %p100
      %p102 = scmp.ne.s32.totalorder %s94, %s96
      %p103 = scmp.eq.s32.totalorder %s23, 1
      %p104 = por %p102, %p103
      %p105 = scmp.ne.s32.totalorder %s96, %s97
      %p106 = scmp.eq.s32.totalorder %s23, 0
      %p107 = por %p105, %p106
      %p108 = scmp.ne.s32.totalorder %s96, %s97
      %p109 = scmp.eq.s32.totalorder %s24, 1
      %p110 = por %p108, %p109
      %p112 = scmp.ne.s32.totalorder %s97, %s111
      %p113 = scmp.eq.s32.totalorder %s24, 0
      %p114 = por %p112, %p113
      %s115 = ssub.s32 %s25, %s37
      %s116 = ssub.s32 %s26, %s33
      %s117 = sor.u32 %s115, %s116
      %p118 = scmp.eq.s32.totalorder %s117, 0
      %s120 = sadd.s32 %s119, 1
      %s121 = scalar_select %p118, %s119, %s120
      %p124 = pneg %p118
      %p125 = scmp.eq.s32.totalorder %s18, 1
      %p126 = por %p124, %p125
      %p127 = scmp.ne.s32.totalorder %s119, %s122
      %p128 = scmp.eq.s32.totalorder %s18, 0
      %p129 = por %p127, %p128
      %p130 = scmp.ne.s32.totalorder %s119, %s122
      %p131 = scmp.eq.s32.totalorder %s23, 1
      %p132 = por %p130, %p131
      %p133 = scmp.ne.s32.totalorder %s122, %s123
      %p134 = scmp.eq.s32.totalorder %s23, 0
      %p135 = por %p133, %p134
      %p136 = scmp.ne.s32.totalorder %s122, %s123
      %p137 = scmp.eq.s32.totalorder %s24, 1
      %p138 = por %p136, %p137
      %p140 = scmp.ne.s32.totalorder %s123, %s139
      %p141 = scmp.eq.s32.totalorder %s24, 0
      %p142 = por %p140, %p141
      %p143 = scmp.le.s32.totalorder 1, %s18
      %p144 = scmp.lt.s32.totalorder %s18, 3
      %p145 = pnand %p143, %p144
      %p146 = pneg %p145
      // Predicated region
      $region9: #{tpu_custom_call.1} parent=5 // pred_check
        _
      $region10: #{tpu_custom_call.1} parent=5 // pred_check_branch
        %148 = sbr.rel (%p145) target = $region12
      $region11: #{tpu_custom_call.1} parent=5 // pred_region
        %s149 = ssub.s32 %s18, 1
        // Predicated region
        $region13: #{tpu_custom_call.1} parent=11 // pred_check
          %p150 = pneg %p107
        $region14: #{tpu_custom_call.1} parent=11 // pred_check_branch
          %152 = sbr.rel (%p150) target = $region16
        $region15: #{tpu_custom_call.1} parent=11 // pred_region
          %s154 = ssub.s32 1024, 1024
          %155 = vsyncadd [#allocation6], %s154
          %s156 = sshll.u32 [#allocation7], 4
          %s157 = int_to_ptr.vmem [resolvable:$true] %s156
          %162 = dma.hbm_to_vmem [thread:$0]  %s2, 1024, %s157, [#allocation6], 128, 128, 8
        $region16: #{tpu_custom_call.1} parent=11 // pred_fallthru
          _
      $region12: #{tpu_custom_call.1} parent=5 // pred_fallthru
        _
      %p163 = scmp.lt.s32.totalorder %s18, 2
      // Predicated region
      $region17: #{tpu_custom_call.1} parent=5 // pred_check
        %p164 = pneg %p163
      $region18: #{tpu_custom_call.1} parent=5 // pred_check_branch
        %166 = sbr.rel (%p164) target = $region20
      $region19: #{tpu_custom_call.1} parent=5 // pred_region
        // Predicated region
        $region21: #{tpu_custom_call.1} parent=19 // pred_check
          %p167 = pneg %p52
        $region22: #{tpu_custom_call.1} parent=19 // pred_check_branch
          %169 = sbr.rel (%p167) target = $region24
        $region23: #{tpu_custom_call.1} parent=19 // pred_region
          %s170 = sand.u32 %s42, 1
          %s171 = scalar_lea.sflag [#allocation3], %s170
          %s172 = sand.u32 %s42, 1
          %s173 = smul.addr %s172, 128
          %s174 = scalar_lea.vmem [#allocation2], %s173
          %s175 = smul.u32 2, %s26
          %s177 = ssub.s32 2048, 2048
          %178 = vsyncadd %s171, %s177
          %s179 = smul.addr %s25, 16
          %s180 = sadd.s32 %s175, %s179
          %s181 = smul.addr %s180, 128
          %s182 = scalar_lea.hbm %s0, %s181
          %s183 = sshll.u32 %s174, 4
          %s184 = int_to_ptr.vmem [resolvable:$true] %s183
          %189 = dma.hbm_to_vmem [thread:$0]  %s182, 2048, %s184, %s171, 256, 256, 16
        $region24: #{tpu_custom_call.1} parent=19 // pred_fallthru
          _
        // Predicated region
        $region25: #{tpu_custom_call.1} parent=19 // pred_check
          %p190 = pneg %p80
        $region26: #{tpu_custom_call.1} parent=19 // pred_check_branch
          %192 = sbr.rel (%p190) target = $region28
        $region27: #{tpu_custom_call.1} parent=19 // pred_region
          %s193 = sand.u32 %s18, 1
          %s194 = scalar_lea.sflag [#allocation6], %s193
          %s195 = sand.u32 %s70, 1
          %s196 = smul.addr %s195, 128
          %s197 = scalar_lea.vmem [#allocation5], %s196
          %s198 = smul.u32 2, %s26
          %s200 = ssub.s32 2048, 2048
          %201 = vsyncadd %s194, %s200
          %s202 = smul.addr %s25, 16
          %s203 = sadd.s32 %s198, %s202
          %s204 = smul.addr %s203, 128
          %s205 = scalar_lea.hbm %s1, %s204
          %s206 = sshll.u32 %s197, 4
          %s207 = int_to_ptr.vmem [resolvable:$true] %s206
          %212 = dma.hbm_to_vmem [thread:$0]  %s205, 2048, %s207, %s194, 256, 256, 16
        $region28: #{tpu_custom_call.1} parent=19 // pred_fallthru
          _
      $region20: #{tpu_custom_call.1} parent=5 // pred_fallthru
        _
      %p213 = scmp.le.s32.totalorder 1, %s18
      %p214 = scmp.lt.s32.totalorder %s18, 3
      %p215 = pnand %p213, %p214
      %p216 = pneg %p215
      // Predicated region
      $region29: #{tpu_custom_call.1} parent=5 // pred_check
        _
      $region30: #{tpu_custom_call.1} parent=5 // pred_check_branch
        %218 = sbr.rel (%p215) target = $region32
      $region31: #{tpu_custom_call.1} parent=5 // pred_region
        %s219 = ssub.s32 %s18, 1
        %s220 = sand.u32 %s45, 1
        %s221 = scalar_lea.sflag [#allocation3], %s220
        %s222 = sand.u32 %s45, 1
        %s223 = smul.addr %s222, 128
        %s224 = scalar_lea.vmem [#allocation2], %s223
        // Predicated region
        $region33: #{tpu_custom_call.1} parent=31 // pred_check
          %p225 = pneg %p58
        $region34: #{tpu_custom_call.1} parent=31 // pred_check_branch
          %227 = sbr.rel (%p225) target = $region36
        $region35: #{tpu_custom_call.1} parent=31 // pred_region
          %228 = dma.done %s221, 2048
        $region36: #{tpu_custom_call.1} parent=31 // pred_fallthru
          _
        %s229 = sand.u32 %s23, 1
        %s230 = scalar_lea.sflag [#allocation6], %s229
        %s231 = sand.u32 %s73, 1
        %s232 = smul.addr %s231, 128
        %s233 = scalar_lea.vmem [#allocation5], %s232
        // Predicated region
        $region37: #{tpu_custom_call.1} parent=31 // pred_check
          %p234 = pneg %p86
        $region38: #{tpu_custom_call.1} parent=31 // pred_check_branch
          %236 = sbr.rel (%p234) target = $region40
        $region39: #{tpu_custom_call.1} parent=31 // pred_region
          %237 = dma.done %s230, 2048
        $region40: #{tpu_custom_call.1} parent=31 // pred_fallthru
          _
        // Predicated region
        $region41: #{tpu_custom_call.1} parent=31 // pred_check
          %p238 = pneg %p107
        $region42: #{tpu_custom_call.1} parent=31 // pred_check_branch
          %240 = sbr.rel (%p238) target = $region44
        $region43: #{tpu_custom_call.1} parent=31 // pred_region
          %241 = dma.done [#allocation6], 1024
        $region44: #{tpu_custom_call.1} parent=31 // pred_fallthru
          _
        %s242 = sand.u32 %s45, 1
        %s243 = scalar_lea.sflag [#allocation3], %s242
        %s244 = sand.u32 %s45, 1
        %s245 = smul.addr %s244, 128
        %s246 = scalar_lea.vmem [#allocation2], %s245
        %p247 = pneg %p58
        %p248 = pneg %p55
        %s249 = sand.u32 %s23, 1
        %s250 = scalar_lea.sflag [#allocation6], %s249
        %s251 = sand.u32 %s73, 1
        %s252 = smul.addr %s251, 128
        %s253 = scalar_lea.vmem [#allocation5], %s252
        %p254 = pneg %p86
        %p255 = pneg %p83
        %p256 = pneg %p107
        %p257 = pneg %p104
        %p258 = pneg %p135
        %p259 = pneg %p132
        %s260 = sand.u32 %s122, 1
        %s261 = scalar_lea.sflag [#allocation4], %s260
        %s262 = sand.u32 %s122, 1
        %s263 = smul.addr %s262, 128
        %s264 = scalar_lea.vmem [#allocation8], %s263
        %s265 = smul.u32 2, %s28
        %s266 = smul.u32 2, %s28
        %s267 = smul.u32 2, %s28
        %v268 = vld [vmem:[%s224] sm:$0xff]
        %v269 = vld [vmem:[%s224 + $0x8] sm:$0xff]
        %v270 = vld [vmem:[%s224 + $0x10] sm:$0xff]
        %v271 = vld [vmem:[%s224 + $0x18] sm:$0xff]
        %v272 = vld [vmem:[%s224 + $0x20] sm:$0xff]
        %v273 = vld [vmem:[%s224 + $0x28] sm:$0xff]
        %v274 = vld [vmem:[%s224 + $0x30] sm:$0xff]
        %v275 = vld [vmem:[%s224 + $0x38] sm:$0xff]
        %v276 = vld [vmem:[%s224 + $0x40] sm:$0xff]
        %v277 = vld [vmem:[%s224 + $0x48] sm:$0xff]
        %v278 = vld [vmem:[%s224 + $0x50] sm:$0xff]
        %v279 = vld [vmem:[%s224 + $0x58] sm:$0xff]
        %v280 = vld [vmem:[%s224 + $0x60] sm:$0xff]
        %v281 = vld [vmem:[%s224 + $0x68] sm:$0xff]
        %v282 = vld [vmem:[%s224 + $0x70] sm:$0xff]
        %v283 = vld [vmem:[%s224 + $0x78] sm:$0xff]
        %v284 = vld [vmem:[%s233] sm:$0xff]
        %v285 = vld [vmem:[%s233 + $0x8] sm:$0xff]
        %v286 = vld [vmem:[%s233 + $0x10] sm:$0xff]
        %v287 = vld [vmem:[%s233 + $0x18] sm:$0xff]
        %v288 = vld [vmem:[%s233 + $0x20] sm:$0xff]
        %v289 = vld [vmem:[%s233 + $0x28] sm:$0xff]
        %v290 = vld [vmem:[%s233 + $0x30] sm:$0xff]
        %v291 = vld [vmem:[%s233 + $0x38] sm:$0xff]
        %v292 = vld [vmem:[%s233 + $0x40] sm:$0xff]
        %v293 = vld [vmem:[%s233 + $0x48] sm:$0xff]
        %v294 = vld [vmem:[%s233 + $0x50] sm:$0xff]
        %v295 = vld [vmem:[%s233 + $0x58] sm:$0xff]
        %v296 = vld [vmem:[%s233 + $0x60] sm:$0xff]
        %v297 = vld [vmem:[%s233 + $0x68] sm:$0xff]
        %v298 = vld [vmem:[%s233 + $0x70] sm:$0xff]
        %v299 = vld [vmem:[%s233 + $0x78] sm:$0xff]
        %v300 = vmul.f32 %v268, %v284
        %v301 = vmul.f32 %v269, %v285
        %v302 = vmul.f32 %v270, %v286
        %v303 = vmul.f32 %v271, %v287
        %v304 = vmul.f32 %v272, %v288
        %v305 = vmul.f32 %v273, %v289
        %v306 = vmul.f32 %v274, %v290
        %v307 = vmul.f32 %v275, %v291
        %v308 = vmul.f32 %v276, %v292
        %v309 = vmul.f32 %v277, %v293
        %v310 = vmul.f32 %v278, %v294
        %v311 = vmul.f32 %v279, %v295
        %v312 = vmul.f32 %v280, %v296
        %v313 = vmul.f32 %v281, %v297
        %v314 = vmul.f32 %v282, %v298
        %v315 = vmul.f32 %v283, %v299
        %v316 = vld [vmem:[#allocation7] sm:$0xff]
        %v317 = vld [vmem:[#allocation7 + $0x8] sm:$0xff]
        %v318 = vld [vmem:[#allocation7 + $0x10] sm:$0xff]
        %v319 = vld [vmem:[#allocation7 + $0x18] sm:$0xff]
        %v320 = vld [vmem:[#allocation7 + $0x20] sm:$0xff]
        %v321 = vld [vmem:[#allocation7 + $0x28] sm:$0xff]
        %v322 = vld [vmem:[#allocation7 + $0x30] sm:$0xff]
        %v323 = vld [vmem:[#allocation7 + $0x38] sm:$0xff]
        %vm324 = vcmask 523264
        %v326 = vsel %vm324, %v316, 0
        %v329 = vsel %vm324, %v317, 0
        %v332 = vsel %vm324, %v318, 0
        %v335 = vsel %vm324, %v319, 0
        %v338 = vsel %vm324, %v320, 0
        %v341 = vsel %vm324, %v321, 0
        %v344 = vsel %vm324, %v322, 0
        %v347 = vsel %vm324, %v323, 0
        %349 = vmatprep.subr.mxu0 0.0
        %350 = vmatpush1.msra.mxu0 0.0
        %351 = vmatprep.subr.mxu0 0.0
        %352 = vmatpush1.msra.mxu0 0.0
        %353 = vmatprep.subr.mxu0 0.0
        %354 = vmatpush1.msra.mxu0 0.0
        %355 = vmatprep.subr.mxu0 0.0
        %356 = vmatpush1.msra.mxu0 0.0
        %357 = vmatprep.subr.mxu0 0.0
        %358 = vmatpush1.msra.mxu0 0.0
        %359 = vmatprep.subr.mxu0 0.0
        %360 = vmatpush1.msra.mxu0 0.0
        %361 = vmatprep.subr.mxu0 0.0
        %362 = vmatpush1.msra.mxu0 0.0
        %363 = vmatprep.subr.mxu0 0.0
        %364 = vmatpush1.msra.mxu0 0.0
        %365 = vmatprep.subr.mxu0 %v315
        %366 = vmatpush1.msra.mxu0 %v314
        %367 = vmatprep.subr.mxu0 %v313
        %368 = vmatpush1.msra.mxu0 %v312
        %369 = vmatprep.subr.mxu0 %v311
        %370 = vmatpush1.msra.mxu0 %v310
        %371 = vmatprep.subr.mxu0 %v309
        %372 = vmatpush1.msra.mxu0 %v308
        %373 = vmatprep.subr.mxu0 %v307
        %374 = vmatpush1.msra.mxu0 %v306
        %375 = vmatprep.subr.mxu0 %v305
        %376 = vmatpush1.msra.mxu0 %v304
        %377 = vmatprep.subr.mxu0 %v303
        %378 = vmatpush1.msra.mxu0 %v302
        %379 = vmatprep.subr.mxu0 %v301
        %380 = vmatpush1.msra.mxu0 %v300
        %381 = vmatprep.subr.mxu0 0.0
        %382 = vmatpush2.msra.mxu0 0.0
        %383 = vmatprep.subr.mxu0 0.0
        %384 = vmatpush2.msra.mxu0 0.0
        %385 = vmatprep.subr.mxu0 0.0
        %386 = vmatpush2.msra.mxu0 0.0
        %387 = vmatprep.subr.mxu0 0.0
        %388 = vmatpush2.msra.mxu0 0.0
        %389 = vmatprep.subr.mxu0 0.0
        %390 = vmatpush2.msra.mxu0 0.0
        %391 = vmatprep.subr.mxu0 0.0
        %392 = vmatpush2.msra.mxu0 0.0
        %393 = vmatprep.subr.mxu0 0.0
        %394 = vmatpush2.msra.mxu0 0.0
        %395 = vmatprep.subr.mxu0 0.0
        %396 = vmatpush2.msra.mxu0 0.0
        %397 = vmatprep.subr.mxu0 0.0
        %398 = vmatpush2.msra.mxu0 0.0
        %399 = vmatprep.subr.mxu0 0.0
        %400 = vmatpush2.msra.mxu0 0.0
        %401 = vmatprep.subr.mxu0 0.0
        %402 = vmatpush2.msra.mxu0 0.0
        %403 = vmatprep.subr.mxu0 0.0
        %404 = vmatpush2.msra.mxu0 0.0
        %405 = vmatprep.subr.mxu0 0.0
        %406 = vmatpush2.msra.mxu0 0.0
        %407 = vmatprep.subr.mxu0 0.0
        %408 = vmatpush2.msra.mxu0 0.0
        %409 = vmatprep.subr.mxu0 0.0
        %410 = vmatpush2.msra.mxu0 0.0
        %411 = vmatprep.subr.mxu0 0.0
        %412 = vmatpush2.msra.mxu0 0.0
        %413 = vmatprep.mubr.f32.mxu0 0.0
        %414 = vmatmul.mubr.f32.gmra.mxu0 %v326
        %v415 = vpop.f32.mrf.mxu0
        %v416 = vadd.f32 0.0, %v415
        %v417 = vpop.f32.mrf.mxu0
        %v418 = vadd.f32 0.0, %v417
        %419 = vmatprep.mubr.f32.mxu0 0.0
        %420 = vmatmul.mubr.f32.gmra.mxu0 %v329
        %v421 = vpop.f32.mrf.mxu0
        %v422 = vadd.f32 0.0, %v421
        %v423 = vpop.f32.mrf.mxu0
        %v424 = vadd.f32 0.0, %v423
        %425 = vmatprep.mubr.f32.mxu0 0.0
        %426 = vmatmul.mubr.f32.gmra.mxu0 %v332
        %v427 = vpop.f32.mrf.mxu0
        %v428 = vadd.f32 0.0, %v427
        %v429 = vpop.f32.mrf.mxu0
        %v430 = vadd.f32 0.0, %v429
        %431 = vmatprep.mubr.f32.mxu0 0.0
        %432 = vmatmul.mubr.f32.gmra.mxu0 %v335
        %v433 = vpop.f32.mrf.mxu0
        %v434 = vadd.f32 0.0, %v433
        %v435 = vpop.f32.mrf.mxu0
        %v436 = vadd.f32 0.0, %v435
        %437 = vmatprep.mubr.f32.mxu0 0.0
        %438 = vmatmul.mubr.f32.gmra.mxu0 %v338
        %v439 = vpop.f32.mrf.mxu0
        %v440 = vadd.f32 0.0, %v439
        %v441 = vpop.f32.mrf.mxu0
        %v442 = vadd.f32 0.0, %v441
        %443 = vmatprep.mubr.f32.mxu0 0.0
        %444 = vmatmul.mubr.f32.gmra.mxu0 %v341
        %v445 = vpop.f32.mrf.mxu0
        %v446 = vadd.f32 0.0, %v445
        %v447 = vpop.f32.mrf.mxu0
        %v448 = vadd.f32 0.0, %v447
        %449 = vmatprep.mubr.f32.mxu0 0.0
        %450 = vmatmul.mubr.f32.gmra.mxu0 %v344
        %v451 = vpop.f32.mrf.mxu0
        %v452 = vadd.f32 0.0, %v451
        %v453 = vpop.f32.mrf.mxu0
        %v454 = vadd.f32 0.0, %v453
        %455 = vmatprep.mubr.f32.mxu0 0.0
        %456 = vmatmul.mubr.f32.gmra.mxu0 %v347
        %v457 = vpop.f32.mrf.mxu0
        %v458 = vadd.f32 0.0, %v457
        %v459 = vpop.f32.mrf.mxu0
        %v460 = vadd.f32 0.0, %v459
        %461 = vdwg.mxu0
        %462 = vst [vmem:[%s264] sm:$0xff] %v416
        %463 = vst [vmem:[%s264 + $0x8] sm:$0xff] %v418
        %464 = vst [vmem:[%s264 + $0x10] sm:$0xff] %v422
        %465 = vst [vmem:[%s264 + $0x18] sm:$0xff] %v424
        %466 = vst [vmem:[%s264 + $0x20] sm:$0xff] %v428
        %467 = vst [vmem:[%s264 + $0x28] sm:$0xff] %v430
        %468 = vst [vmem:[%s264 + $0x30] sm:$0xff] %v434
        %469 = vst [vmem:[%s264 + $0x38] sm:$0xff] %v436
        %470 = vst [vmem:[%s264 + $0x40] sm:$0xff] %v440
        %471 = vst [vmem:[%s264 + $0x48] sm:$0xff] %v442
        %472 = vst [vmem:[%s264 + $0x50] sm:$0xff] %v446
        %473 = vst [vmem:[%s264 + $0x58] sm:$0xff] %v448
        %474 = vst [vmem:[%s264 + $0x60] sm:$0xff] %v452
        %475 = vst [vmem:[%s264 + $0x68] sm:$0xff] %v454
        %476 = vst [vmem:[%s264 + $0x70] sm:$0xff] %v458
        %477 = vst [vmem:[%s264 + $0x78] sm:$0xff] %v460
        %s478 = sand.u32 %s122, 1
        %s479 = scalar_lea.sflag [#allocation4], %s478
        %s480 = sand.u32 %s122, 1
        %s481 = smul.addr %s480, 128
        %s482 = scalar_lea.vmem [#allocation8], %s481
        // Predicated region
        $region45: #{tpu_custom_call.1} parent=31 // pred_check
          %p483 = pneg %p132
        $region46: #{tpu_custom_call.1} parent=31 // pred_check_branch
          %485 = sbr.rel (%p483) target = $region48
        $region47: #{tpu_custom_call.1} parent=31 // pred_region
          %s486 = smul.u32 2, %s28
          %s488 = ssub.s32 2048, 2048
          %489 = vsyncadd %s479, %s488
          %s490 = smul.addr %s27, 16
          %s491 = sadd.s32 %s486, %s490
          %s492 = smul.addr %s491, 128
          %s493 = scalar_lea.hbm %s3, %s492
          %s494 = sshll.u32 %s482, 4
          %s495 = int_to_ptr.vmem [resolvable:$true] %s494
          %500 = dma.vmem_to_hbm [thread:$0]  %s495, 2048, %s493, %s479, 256, 256, 16
        $region48: #{tpu_custom_call.1} parent=31 // pred_fallthru
          _
      $region32: #{tpu_custom_call.1} parent=5 // pred_fallthru
        _
      %p501 = scmp.le.s32.totalorder 2, %s18
      // Predicated region
      $region49: #{tpu_custom_call.1} parent=5 // pred_check
        %p502 = pneg %p501
      $region50: #{tpu_custom_call.1} parent=5 // pred_check_branch
        %504 = sbr.rel (%p502) target = $region52
      $region51: #{tpu_custom_call.1} parent=5 // pred_region
        %s505 = ssub.s32 %s18, 2
        // Predicated region
        $region53: #{tpu_custom_call.1} parent=51 // pred_check
          %p506 = pneg %p138
        $region54: #{tpu_custom_call.1} parent=51 // pred_check_branch
          %508 = sbr.rel (%p506) target = $region56
        $region55: #{tpu_custom_call.1} parent=51 // pred_region
          %s509 = sand.u32 %s123, 1
          %s510 = scalar_lea.sflag [#allocation4], %s509
          %s511 = sand.u32 %s123, 1
          %s512 = smul.addr %s511, 128
          %s513 = scalar_lea.vmem [#allocation8], %s512
          %514 = dma.done %s510, 2048
        $region56: #{tpu_custom_call.1} parent=51 // pred_fallthru
          _
      $region52: #{tpu_custom_call.1} parent=5 // pred_fallthru
        _
    $region6: #{tpu_custom_call.1} parent=1 // loop_footer
      %s22 = sadd.s32 1, %s18
    $region7: #{tpu_custom_call.1} parent=1 // loop_footer_branch
      %17 = sbr.rel target = $region3
    $region8: #{tpu_custom_call.1} parent=1 // loop_exit
      _
    %515 = vsyncpa [#allocation3], 1
    %s516 = scalar_lea.sflag [#allocation3], 1
    %517 = vsyncpa %s516, 1
    %518 = vsyncpa [#allocation6], 1
    %s519 = scalar_lea.sflag [#allocation6], 1
    %520 = vsyncpa %s519, 1
    %521 = vsyncpa [#allocation4], 1
    %s522 = scalar_lea.sflag [#allocation4], 1
    %523 = vsyncpa %s522, 1

</llo_original>
